<compile_context>
chip_gen: v5e
topology: v5e:2x2
jax: 0.10.0
libtpu: 0.0.40
codegen_flags: <defaults>
</compile_context>

<pallas_src>
import functools

import jax
import jax.numpy as jnp
import numpy as np
from jax.experimental import pallas as pl
from jax.experimental.pallas import tpu as pltpu


def _round_up(x, m):
    return ((x + m - 1) // m) * m


def _node_ce_kernel(n_valid, tiles_per_split,
                    flab_ref, xT_ref, lab_ref, gl_ref, w_ref,
                    wnll_out, w_out, func_out,
                    acc_wnll, acc_w, cls_iota):
    s = pl.program_id(0)          # split (parallel -> one per TensorCore on v7x)
    j = pl.program_id(1)          # node-tile within split (running reduction)
    C, T = xT_ref.shape

    @pl.when(j == 0)
    def _init():
        acc_wnll[...] = jnp.zeros_like(acc_wnll)
        acc_w[...] = jnp.zeros_like(acc_w)
        cls_iota[...] = jax.lax.broadcasted_iota(jnp.int32, cls_iota.shape, 0)

    # Global node id of every lane in this tile (UNclamped: duplicated tail tiles from the
    # clamped index_map and the partial last tile are fully masked below).
    gtile = s * tiles_per_split + j
    col_ids = gtile * T + jax.lax.broadcasted_iota(jnp.int32, (1, T), 1)
    valid = col_ids < n_valid                                        # (1, T)

    x = xT_ref[...].astype(jnp.float32)                              # (C, T) lane-dense
    labels = lab_ref[...]                                            # (1, T) int32
    w = w_ref[...].astype(jnp.float32)                               # (C, 1)

    onehot = cls_iota[...] == labels                                 # (C, T)
    m = jnp.max(x, axis=0, keepdims=True)                            # (1, T) sublane reduce
    lse = m + jnp.log(jnp.sum(jnp.exp(x - m), axis=0, keepdims=True))
    x_at = jnp.sum(jnp.where(onehot, x, 0.0), axis=0, keepdims=True)
    w_at = jnp.sum(jnp.where(onehot, w, 0.0), axis=0, keepdims=True)
    nll = lse - x_at                                                 # (1, T)

    # Lane-dense partial accumulation; where-SELECTS (not multiplies) keep NaN/Inf from
    # invalid lanes out of the accumulators.
    acc_wnll[...] += jnp.where(valid, w_at * nll, 0.0)
    acc_w[...] += jnp.where(valid, w_at, 0.0)

    @pl.when(j == pl.num_programs(1) - 1)
    def _finalize():
        wnll_total = jnp.sum(acc_wnll[...])                          # single cross-lane reduce
        w_total = jnp.sum(acc_w[...])

        # Function-level CE on the single graph sample (tiny, C elements).  The weighted
        # mean of one sample is just its NLL -> no gw*nll/gw divide, no 0/0 hazard.
        g = gl_ref[...].astype(jnp.float32)                          # (1, C)
        flab = flab_ref[0]
        g_oh = jax.lax.broadcasted_iota(jnp.int32, g.shape, 1) == flab
        gm = jnp.max(g, axis=1, keepdims=True)
        glse = gm + jnp.log(jnp.sum(jnp.exp(g - gm), axis=1, keepdims=True))
        func = (glse - jnp.sum(jnp.where(g_oh, g, 0.0), axis=1, keepdims=True))[0, 0]

        wnll_out[...] = jnp.full(wnll_out.shape, wnll_total, jnp.float32)
        w_out[...] = jnp.full(w_out.shape, w_total, jnp.float32)
        func_out[...] = jnp.full(func_out.shape, func, jnp.float32)


def learnable_weighted_loss(alpha, node_logits, node_labels, graph_logits,
                            func_label, class_weights=None, *, tile_n=None):
    N, C = node_logits.shape
    if class_weights is None:
        class_weights = jnp.ones((C,), jnp.float32)

    # ---- lane-dense relayout (layout plumbing; a producer could emit (C, N) directly) ----
    xT = jnp.transpose(node_logits)                            # (C, N), native dtype
    labels_row = node_labels.astype(jnp.int32).reshape(1, N)   # lane-dense labels
    gl = graph_logits.reshape(1, C)                            # == graph_logits.view(1, -1)
    w_col = class_weights.astype(jnp.float32).reshape(C, 1)
    flab_arr = jnp.asarray(func_label, jnp.int32).reshape(1)   # == func_label.view(1)

    # ---- byte-targeted, generation-aware tile sizing ----
    itemsize = jnp.dtype(node_logits.dtype).itemsize
    try:
        vmem_cap = int(pltpu.get_tpu_info().vmem_capacity_bytes)  # 64 MiB v7x, 128 MiB v5e/v6e
    except Exception:
        vmem_cap = 64 * 1024 * 1024
    r_c = _round_up(C, 8)
    # VMEM bytes per node column: double-buffered logits + labels, two f32 accumulators,
    # hoisted class-id iota (everything sublane-padded to 8).
    col_bytes = 2 * r_c * itemsize + 2 * 8 * 4 + 2 * 8 * 4 + r_c * 4
    budget = max(2 << 20, min(32 << 20, vmem_cap // 4))        # 16 MiB on v7x, 32 MiB v5e/v6e
    cap_cols = max(128, (budget // col_bytes) // 128 * 128)
    tile = _round_up(N, 128) if tile_n is None else _round_up(tile_n, 128)
    tile = min(tile, _round_up(N, 128), cap_cols)
    vmem_limit = int(min(vmem_cap // 2, max(32 << 20, 2 * budget)))

    # ---- split the N reduction across (up to) two TensorCores (v7x; serial elsewhere) ----
    tiles_total = -(-N // tile)
    num_splits = 2 if tiles_total >= 2 else 1
    tiles_per_split = -(-tiles_total // num_splits)
    last_tile = tiles_total - 1

    def tile_map(s, j):      # clamp in-range; duplicated tail tiles are masked in-kernel
        return (0, jnp.minimum(s * tiles_per_split + j, last_tile))

    kernel = functools.partial(_node_ce_kernel, N, tiles_per_split)
    wnll_p, w_p, func_p = pl.pallas_call(
        kernel,
        out_shape=(jax.ShapeDtypeStruct((num_splits, 1, 128), jnp.float32),
                   jax.ShapeDtypeStruct((num_splits, 1, 128), jnp.float32),
                   jax.ShapeDtypeStruct((num_splits, 1, 128), jnp.float32)),
        grid=(num_splits, tiles_per_split),
        in_specs=[
            pl.BlockSpec(memory_space=pltpu.MemorySpace.SMEM),   # func_label scalar
            pl.BlockSpec((C, tile), tile_map),                   # node_logits^T tile
            pl.BlockSpec((1, tile), tile_map),                   # node_labels row tile
            pl.BlockSpec((1, C), lambda s, j: (0, 0)),           # graph_logits (resident)
            pl.BlockSpec((C, 1), lambda s, j: (0, 0)),           # class_weights (resident)
        ],
        out_specs=(
            pl.BlockSpec((1, 1, 128), lambda s, j: (s, 0, 0)),   # per-split sum w*nll
            pl.BlockSpec((1, 1, 128), lambda s, j: (s, 0, 0)),   # per-split sum w
            pl.BlockSpec((1, 1, 128), lambda s, j: (s, 0, 0)),   # func CE (same each split)
        ),
        scratch_shapes=[pltpu.VMEM((1, tile), jnp.float32),      # lane-wise sum w*nll
                        pltpu.VMEM((1, tile), jnp.float32),      # lane-wise sum w
                        pltpu.VMEM((C, tile), jnp.int32)],       # hoisted class-id iota
        compiler_params=pltpu.CompilerParams(
            dimension_semantics=("parallel", "arbitrary"),
            vmem_limit_bytes=vmem_limit),
    )(flab_arr, xT, labels_row, gl, w_col)

    # Cross-split combine + learnable convex blend (a handful of scalar flops, per review).
    node_loss = jnp.sum(wnll_p[:, 0, 0]) / jnp.sum(w_p[:, 0, 0])
    func_loss = func_p[0, 0, 0]
    alpha = jnp.asarray(alpha, jnp.float32)
    return alpha * node_loss + (1.0 - alpha) * func_loss


def _reference(alpha, node_logits, node_labels, graph_logits, func_label, class_weights):
    def weighted_ce(logits, labels, w):
        logp = jax.nn.log_softmax(logits.astype(jnp.float32), axis=-1)
        nll = -jnp.take_along_axis(logp, labels[:, None], axis=-1)[:, 0]
        wi = w[labels]
        return jnp.sum(wi * nll) / jnp.sum(wi)

    node_loss = weighted_ce(node_logits, node_labels.astype(jnp.int32), class_weights)
    func_loss = weighted_ce(graph_logits.reshape(1, -1),
                            jnp.asarray(func_label, jnp.int32).reshape(1), class_weights)
    return alpha * node_loss + (1.0 - alpha) * func_loss


if __name__ == "__main__":
    key = jax.random.PRNGKey(0)
    N, C = 300, 7                       # 300 nodes, 7 classes
    k1, k2, k3, k4 = jax.random.split(key, 4)

    node_logits = jax.random.normal(k1, (N, C), jnp.float32)
    node_labels = jax.random.randint(k2, (N,), 0, C, jnp.int32)
    graph_logits = jax.random.normal(k3, (C,), jnp.float32)
    func_label = jax.random.randint(k4, (), 0, C, jnp.int32)

    alpha = jnp.float32(0.5)            # matches nn.Parameter(torch.tensor(0.5)) init
    class_weights = jnp.linspace(0.5, 1.5, C, dtype=jnp.float32)

    # f32 path: tile_n=128 -> 3 node tiles, 2-way split, partial + clamped-duplicate tiles.
    loss = learnable_weighted_loss(alpha, node_logits, node_labels,
                                   graph_logits, func_label, class_weights,
                                   tile_n=128)
    loss = jax.block_until_ready(loss)
    ref = _reference(alpha, node_logits, node_labels, graph_logits,
                     func_label, class_weights)
    np.testing.assert_allclose(np.asarray(loss), np.asarray(ref), rtol=1e-4, atol=1e-5)

    # bf16 logits stream at native width (2 B/elem); compute stays f32 on-chip.
    loss_bf16 = learnable_weighted_loss(alpha, node_logits.astype(jnp.bfloat16),
                                        node_labels, graph_logits.astype(jnp.bfloat16),
                                        func_label, class_weights, tile_n=128)
    loss_bf16 = jax.block_until_ready(loss_bf16)
    ref_bf16 = _reference(alpha, node_logits.astype(jnp.bfloat16), node_labels,
                          graph_logits.astype(jnp.bfloat16), func_label, class_weights)
    np.testing.assert_allclose(np.asarray(loss_bf16), np.asarray(ref_bf16),
                               rtol=1e-3, atol=1e-4)

    print("KERNEL_OK")
</pallas_src>

<mosaic_0001>
module attributes {stable_mosaic.version = 11 : i64} {
  func.func @_node_ce_kernel(%arg0: i32, %arg1: i32, %arg2: memref<1xi32, #tpu.memory_space<smem>>, %arg3: memref<7x128xf32, #tpu.memory_space<vmem>>, %arg4: memref<1x128xi32, #tpu.memory_space<vmem>>, %arg5: memref<1x7xf32, #tpu.memory_space<vmem>>, %arg6: memref<7x1xf32, #tpu.memory_space<vmem>>, %arg7: memref<1x1x128xf32, #tpu.memory_space<vmem>>, %arg8: memref<1x1x128xf32, #tpu.memory_space<vmem>>, %arg9: memref<1x1x128xf32, #tpu.memory_space<vmem>>, %arg10: memref<1x128xf32, #tpu.memory_space<vmem>>, %arg11: memref<1x128xf32, #tpu.memory_space<vmem>>, %arg12: memref<7x128xi32, #tpu.memory_space<vmem>>) attributes {dimension_semantics = [#tpu.dimension_semantics<parallel>, #tpu.dimension_semantics<arbitrary>], iteration_bounds = array<i64: 2, 2>, scalar_prefetch = 0 : i64, scratch_operands = 3 : i64, tpu.core_type = #tpu.core_type<tc>, window_params = [{transform_indices = @transform_0, window_bounds = array<i64: 1>}, {transform_indices = @transform_1, window_bounds = array<i64: 7, 128>}, {transform_indices = @transform_2, window_bounds = array<i64: 1, 128>}, {pipeline_mode = #tpu.pipeline_mode<synchronous>, transform_indices = @transform_3, window_bounds = array<i64: 1, 7>}, {pipeline_mode = #tpu.pipeline_mode<synchronous>, transform_indices = @transform_4, window_bounds = array<i64: 7, 1>}, {transform_indices = @transform_5, window_bounds = array<i64: 1, 1, 128>}, {transform_indices = @transform_6, window_bounds = array<i64: 1, 1, 128>}, {transform_indices = @transform_7, window_bounds = array<i64: 1, 1, 128>}]} {
    %c0_i32 = arith.constant 0 : i32
    %0 = arith.cmpi eq, %arg1, %c0_i32 : i32
    %1 = arith.extui %0 : i1 to i32
    %c0_i32_0 = arith.constant 0 : i32
    %2 = arith.cmpi ne, %1, %c0_i32_0 : i32
    scf.if %2 {
      %cst_24 = arith.constant 0.000000e+00 : f32
      %51 = vector.broadcast %cst_24 : f32 to vector<1x128xf32>
      %c0_25 = arith.constant 0 : index
      %c0_26 = arith.constant 0 : index
      %52 = vector.load %arg10[%c0_25, %c0_26] : memref<1x128xf32, #tpu.memory_space<vmem>>, vector<1x128xf32>
      tpu.vector_store %arg10[%c0_25, %c0_26], %51 {strides = array<i32>} : memref<1x128xf32, #tpu.memory_space<vmem>>, vector<1x128xf32>,
      %cst_27 = arith.constant 0.000000e+00 : f32
      %53 = vector.broadcast %cst_27 : f32 to vector<1x128xf32>
      %c0_28 = arith.constant 0 : index
      %c0_29 = arith.constant 0 : index
      %54 = vector.load %arg11[%c0_28, %c0_29] : memref<1x128xf32, #tpu.memory_space<vmem>>, vector<1x128xf32>
      tpu.vector_store %arg11[%c0_28, %c0_29], %53 {strides = array<i32>} : memref<1x128xf32, #tpu.memory_space<vmem>>, vector<1x128xf32>,
      %55 = tpu.iota {dimensions = array<i32: 0>} : vector<7x128xi32>
      %c0_30 = arith.constant 0 : index
      %c0_31 = arith.constant 0 : index
      %56 = vector.load %arg12[%c0_30, %c0_31] : memref<7x128xi32, #tpu.memory_space<vmem>>, vector<7x128xi32>
      tpu.vector_store %arg12[%c0_30, %c0_31], %55 {strides = array<i32>} : memref<7x128xi32, #tpu.memory_space<vmem>>, vector<7x128xi32>,
    } else {
    }
    %c2_i32 = arith.constant 2 : i32
    %3 = arith.muli %arg0, %c2_i32 : i32
    %4 = arith.addi %3, %arg1 : i32
    %c128_i32 = arith.constant 128 : i32
    %5 = arith.muli %4, %c128_i32 : i32
    %6 = tpu.iota {dimensions = array<i32: 1>} : vector<1x128xi32>
    %7 = vector.broadcast %5 : i32 to vector<1x128xi32>
    %8 = arith.addi %7, %6 : vector<1x128xi32>
    %c300_i32 = arith.constant 300 : i32
    %9 = vector.broadcast %c300_i32 : i32 to vector<1x128xi32>
    %10 = arith.cmpi slt, %8, %9 : vector<1x128xi32>
    %c0 = arith.constant 0 : index
    %c0_1 = arith.constant 0 : index
    %11 = vector.load %arg3[%c0, %c0_1] : memref<7x128xf32, #tpu.memory_space<vmem>>, vector<7x128xf32>
    %c0_2 = arith.constant 0 : index
    %c0_3 = arith.constant 0 : index
    %12 = vector.load %arg4[%c0_2, %c0_3] : memref<1x128xi32, #tpu.memory_space<vmem>>, vector<1x128xi32>
    %c0_4 = arith.constant 0 : index
    %c0_5 = arith.constant 0 : index
    %13 = vector.load %arg6[%c0_4, %c0_5] : memref<7x1xf32, #tpu.memory_space<vmem>>, vector<7x1xf32>
    %c0_6 = arith.constant 0 : index
    %c0_7 = arith.constant 0 : index
    %14 = vector.load %arg12[%c0_6, %c0_7] : memref<7x128xi32, #tpu.memory_space<vmem>>, vector<7x128xi32>
    %15 = vector.broadcast %12 : vector<1x128xi32> to vector<7x128xi32>
    %16 = arith.cmpi eq, %14, %15 : vector<7x128xi32>
    %cst = arith.constant dense<0xFF800000> : vector<128xf32>
    %17 = vector.multi_reduction <maximumf>, %11, %cst [0] : vector<7x128xf32> to vector<128xf32>
    %18 = vector.shape_cast %17 : vector<128xf32> to vector<1x128xf32>
    %19 = vector.broadcast %18 : vector<1x128xf32> to vector<7x128xf32>
    %20 = arith.subf %11, %19 : vector<7x128xf32>
    %21 = math.exp %20 : vector<7x128xf32>
    %cst_8 = arith.constant dense<0.000000e+00> : vector<128xf32>
    %22 = vector.multi_reduction <add>, %21, %cst_8 [0] : vector<7x128xf32> to vector<128xf32>
    %23 = vector.shape_cast %22 : vector<128xf32> to vector<1x128xf32>
    %24 = math.log %23 : vector<1x128xf32>
    %25 = arith.addf %18, %24 : vector<1x128xf32>
    %cst_9 = arith.constant 0.000000e+00 : f32
    %26 = vector.broadcast %cst_9 : f32 to vector<7x128xf32>
    %27 = arith.select %16, %11, %26 : vector<7x128xi1>, vector<7x128xf32>
    %cst_10 = arith.constant dense<0.000000e+00> : vector<128xf32>
    %28 = vector.multi_reduction <add>, %27, %cst_10 [0] : vector<7x128xf32> to vector<128xf32>
    %29 = vector.shape_cast %28 : vector<128xf32> to vector<1x128xf32>
    %cst_11 = arith.constant 0.000000e+00 : f32
    %30 = vector.shape_cast %13 : vector<7x1xf32> to vector<7x1xf32>
    %31 = vector.broadcast %30 : vector<7x1xf32> to vector<7x128xf32>
    %32 = vector.broadcast %cst_11 : f32 to vector<7x128xf32>
    %33 = arith.select %16, %31, %32 : vector<7x128xi1>, vector<7x128xf32>
    %cst_12 = arith.constant dense<0.000000e+00> : vector<128xf32>
    %34 = vector.multi_reduction <add>, %33, %cst_12 [0] : vector<7x128xf32> to vector<128xf32>
    %35 = vector.shape_cast %34 : vector<128xf32> to vector<1x128xf32>
    %36 = arith.subf %25, %29 : vector<1x128xf32>
    %c0_13 = arith.constant 0 : index
    %c0_14 = arith.constant 0 : index
    %37 = vector.load %arg10[%c0_13, %c0_14] : memref<1x128xf32, #tpu.memory_space<vmem>>, vector<1x128xf32>
    %38 = arith.mulf %35, %36 : vector<1x128xf32>
    %cst_15 = arith.constant 0.000000e+00 : f32
    %39 = vector.broadcast %cst_15 : f32 to vector<1x128xf32>
    %40 = arith.select %10, %38, %39 : vector<1x128xi1>, vector<1x128xf32>
    %41 = arith.addf %37, %40 : vector<1x128xf32>
    %c0_16 = arith.constant 0 : index
    %c0_17 = arith.constant 0 : index
    %42 = vector.load %arg10[%c0_16, %c0_17] : memref<1x128xf32, #tpu.memory_space<vmem>>, vector<1x128xf32>
    tpu.vector_store %arg10[%c0_16, %c0_17], %41 {strides = array<i32>} : memref<1x128xf32, #tpu.memory_space<vmem>>, vector<1x128xf32>,
    %c0_18 = arith.constant 0 : index
    %c0_19 = arith.constant 0 : index
    %43 = vector.load %arg11[%c0_18, %c0_19] : memref<1x128xf32, #tpu.memory_space<vmem>>, vector<1x128xf32>
    %cst_20 = arith.constant 0.000000e+00 : f32
    %44 = vector.broadcast %cst_20 : f32 to vector<1x128xf32>
    %45 = arith.select %10, %35, %44 : vector<1x128xi1>, vector<1x128xf32>
    %46 = arith.addf %43, %45 : vector<1x128xf32>
    %c0_21 = arith.constant 0 : index
    %c0_22 = arith.constant 0 : index
    %47 = vector.load %arg11[%c0_21, %c0_22] : memref<1x128xf32, #tpu.memory_space<vmem>>, vector<1x128xf32>
    tpu.vector_store %arg11[%c0_21, %c0_22], %46 {strides = array<i32>} : memref<1x128xf32, #tpu.memory_space<vmem>>, vector<1x128xf32>,
    %c1_i32 = arith.constant 1 : i32
    %48 = arith.cmpi eq, %arg1, %c1_i32 : i32
    %49 = arith.extui %48 : i1 to i32
    %c0_i32_23 = arith.constant 0 : i32
    %50 = arith.cmpi ne, %49, %c0_i32_23 : i32
    scf.if %50 {
      %c0_24 = arith.constant 0 : index
      %c0_25 = arith.constant 0 : index
      %51 = vector.load %arg10[%c0_24, %c0_25] : memref<1x128xf32, #tpu.memory_space<vmem>>, vector<1x128xf32>
      %52 = vector.shape_cast %51 : vector<1x128xf32> to vector<1x1x128xf32>
      %cst_26 = arith.constant dense<0.000000e+00> : vector<1xf32>
      %53 = vector.multi_reduction <add>, %52, %cst_26 [1, 2] : vector<1x1x128xf32> to vector<1xf32>
      %54 = vector.shape_cast %53 : vector<1xf32> to vector<1x1x1xf32>
      %55 = vector.extract %54[0, 0, 0] : f32 from vector<1x1x1xf32>
      %c0_27 = arith.constant 0 : index
      %c0_28 = arith.constant 0 : index
      %56 = vector.load %arg11[%c0_27, %c0_28] : memref<1x128xf32, #tpu.memory_space<vmem>>, vector<1x128xf32>
      %57 = vector.shape_cast %56 : vector<1x128xf32> to vector<1x1x128xf32>
      %cst_29 = arith.constant dense<0.000000e+00> : vector<1xf32>
      %58 = vector.multi_reduction <add>, %57, %cst_29 [1, 2] : vector<1x1x128xf32> to vector<1xf32>
      %59 = vector.shape_cast %58 : vector<1xf32> to vector<1x1x1xf32>
      %60 = vector.extract %59[0, 0, 0] : f32 from vector<1x1x1xf32>
      %c0_30 = arith.constant 0 : index
      %c0_31 = arith.constant 0 : index
      %61 = vector.load %arg5[%c0_30, %c0_31] : memref<1x7xf32, #tpu.memory_space<vmem>>, vector<1x7xf32>
      %c0_32 = arith.constant 0 : index
      %62 = memref.load %arg2[%c0_32] : memref<1xi32, #tpu.memory_space<smem>>
      %63 = tpu.iota {dimensions = array<i32: 1>} : vector<1x7xi32>
      %64 = vector.broadcast %62 : i32 to vector<1x7xi32>
      %65 = arith.cmpi eq, %63, %64 : vector<1x7xi32>
      %cst_33 = arith.constant dense<0xFF800000> : vector<1xf32>
      %66 = vector.multi_reduction <maximumf>, %61, %cst_33 [1] : vector<1x7xf32> to vector<1xf32>
      %67 = vector.shape_cast %66 : vector<1xf32> to vector<1x1xf32>
      %68 = vector.broadcast %67 : vector<1x1xf32> to vector<1x7xf32>
      %69 = arith.subf %61, %68 : vector<1x7xf32>
      %70 = math.exp %69 : vector<1x7xf32>
      %cst_34 = arith.constant dense<0.000000e+00> : vector<1xf32>
      %71 = vector.multi_reduction <add>, %70, %cst_34 [1] : vector<1x7xf32> to vector<1xf32>
      %72 = vector.shape_cast %71 : vector<1xf32> to vector<1x1xf32>
      %73 = math.log %72 : vector<1x1xf32>
      %74 = arith.addf %67, %73 : vector<1x1xf32>
      %cst_35 = arith.constant 0.000000e+00 : f32
      %75 = vector.broadcast %cst_35 : f32 to vector<1x7xf32>
      %76 = arith.select %65, %61, %75 : vector<1x7xi1>, vector<1x7xf32>
      %cst_36 = arith.constant dense<0.000000e+00> : vector<1xf32>
      %77 = vector.multi_reduction <add>, %76, %cst_36 [1] : vector<1x7xf32> to vector<1xf32>
      %78 = vector.shape_cast %77 : vector<1xf32> to vector<1x1xf32>
      %79 = arith.subf %74, %78 : vector<1x1xf32>
      %80 = vector.extract %79[0, 0] : f32 from vector<1x1xf32>
      %81 = vector.broadcast %55 : f32 to vector<1x1x128xf32>
      %c0_37 = arith.constant 0 : index
      %c0_38 = arith.constant 0 : index
      %c0_39 = arith.constant 0 : index
      %82 = vector.load %arg7[%c0_37, %c0_38, %c0_39] : memref<1x1x128xf32, #tpu.memory_space<vmem>>, vector<1x1x128xf32>
      tpu.vector_store %arg7[%c0_37, %c0_38, %c0_39], %81 {strides = array<i32>} : memref<1x1x128xf32, #tpu.memory_space<vmem>>, vector<1x1x128xf32>,
      %83 = vector.broadcast %60 : f32 to vector<1x1x128xf32>
      %c0_40 = arith.constant 0 : index
      %c0_41 = arith.constant 0 : index
      %c0_42 = arith.constant 0 : index
      %84 = vector.load %arg8[%c0_40, %c0_41, %c0_42] : memref<1x1x128xf32, #tpu.memory_space<vmem>>, vector<1x1x128xf32>
      tpu.vector_store %arg8[%c0_40, %c0_41, %c0_42], %83 {strides = array<i32>} : memref<1x1x128xf32, #tpu.memory_space<vmem>>, vector<1x1x128xf32>,
      %85 = vector.broadcast %80 : f32 to vector<1x1x128xf32>
      %c0_43 = arith.constant 0 : index
      %c0_44 = arith.constant 0 : index
      %c0_45 = arith.constant 0 : index
      %86 = vector.load %arg9[%c0_43, %c0_44, %c0_45] : memref<1x1x128xf32, #tpu.memory_space<vmem>>, vector<1x1x128xf32>
      tpu.vector_store %arg9[%c0_43, %c0_44, %c0_45], %85 {strides = array<i32>} : memref<1x1x128xf32, #tpu.memory_space<vmem>>, vector<1x1x128xf32>,
    } else {
    }
    return
  }
  func.func @transform_0(%arg0: i32, %arg1: i32) -> i32 {
    %c0_i32 = arith.constant 0 : i32
    %c0_i32_0 = arith.constant 0 : i32
    return %c0_i32 : i32
  }
  func.func @transform_1(%arg0: i32, %arg1: i32) -> (i32, i32) {
    %c2_i32 = arith.constant 2 : i32
    %0 = arith.muli %arg0, %c2_i32 : i32
    %1 = arith.addi %0, %arg1 : i32
    %c2_i32_0 = arith.constant 2 : i32
    %2 = arith.minsi %1, %c2_i32_0 : i32
    %c0_i32 = arith.constant 0 : i32
    %c0_i32_1 = arith.constant 0 : i32
    return %c0_i32, %2 : i32, i32
  }
  func.func @transform_2(%arg0: i32, %arg1: i32) -> (i32, i32) {
    %c2_i32 = arith.constant 2 : i32
    %0 = arith.muli %arg0, %c2_i32 : i32
    %1 = arith.addi %0, %arg1 : i32
    %c2_i32_0 = arith.constant 2 : i32
    %2 = arith.minsi %1, %c2_i32_0 : i32
    %c0_i32 = arith.constant 0 : i32
    %c0_i32_1 = arith.constant 0 : i32
    return %c0_i32, %2 : i32, i32
  }
  func.func @transform_3(%arg0: i32, %arg1: i32) -> (i32, i32) {
    %c0_i32 = arith.constant 0 : i32
    %c0_i32_0 = arith.constant 0 : i32
    %c0_i32_1 = arith.constant 0 : i32
    return %c0_i32, %c0_i32_0 : i32, i32
  }
  func.func @transform_4(%arg0: i32, %arg1: i32) -> (i32, i32) {
    %c0_i32 = arith.constant 0 : i32
    %c0_i32_0 = arith.constant 0 : i32
    %c0_i32_1 = arith.constant 0 : i32
    return %c0_i32, %c0_i32_0 : i32, i32
  }
  func.func @transform_5(%arg0: i32, %arg1: i32) -> (i32, i32, i32) {
    %c0_i32 = arith.constant 0 : i32
    %c0_i32_0 = arith.constant 0 : i32
    %c0_i32_1 = arith.constant 0 : i32
    return %arg0, %c0_i32, %c0_i32_0 : i32, i32, i32
  }
  func.func @transform_6(%arg0: i32, %arg1: i32) -> (i32, i32, i32) {
    %c0_i32 = arith.constant 0 : i32
    %c0_i32_0 = arith.constant 0 : i32
    %c0_i32_1 = arith.constant 0 : i32
    return %arg0, %c0_i32, %c0_i32_0 : i32, i32, i32
  }
  func.func @transform_7(%arg0: i32, %arg1: i32) -> (i32, i32, i32) {
    %c0_i32 = arith.constant 0 : i32
    %c0_i32_0 = arith.constant 0 : i32
    %c0_i32_1 = arith.constant 0 : i32
    return %arg0, %c0_i32, %c0_i32_0 : i32, i32, i32
  }
}

</mosaic_0001>

<llo_original>
// kernel: tpu_custom_call.1
$region0: #{tpu_custom_call.1}
  #allocation0 [shape = 'u32[]', space=smem, size = 0x4, offset = 0x4, fixed_abs, tag = 'smem constant byte address 0x4 - core index']
  #allocation1 [shape = 'u32[72,128]{1,0:T(1,128)}', space=vmem, size = 0x9000, scoped, tag = 'internal scratch']
  #allocation2 [shape = 'f32[1,128]{1,0:T(1,128)}', space=vmem, size = 0x200, scoped, tag = 'scratch operand']
  #allocation3 [shape = 'f32[1,128]{1,0:T(1,128)}', space=vmem, size = 0x200, scoped, tag = 'scratch operand']
  #allocation4 [shape = 's32[7,128]{1,0:T(8,128)}', space=vmem, size = 0x1000, scoped, tag = 'scratch operand']
  #allocation5 [shape = 's32[1]{0:T(128)S(6)}', space=smem, size = 0x200, scoped, tag = 'scoped memory for tpu_custom_call.1']
  %s0 = inlined_call_operand.<no memory space> [shape: s32[1], index: 0, kind: input, shape index: {}]
  %s1 = inlined_call_operand.hbm [shape: f32[7,300], index: 1, kind: input, shape index: {}]
  %s2 = inlined_call_operand.vmem [shape: s32[1,300], index: 2, kind: input, shape index: {}]
  %s3 = inlined_call_operand.vmem [shape: f32[1,7], index: 3, kind: input, shape index: {}]
  %s4 = inlined_call_operand.vmem [shape: f32[7,1], index: 4, kind: input, shape index: {}]
  %s5 = inlined_call_operand.hbm [shape: f32[2,1,128], index: 5, kind: output, shape index: {0}]
  %s6 = inlined_call_operand.hbm [shape: f32[2,1,128], index: 6, kind: output, shape index: {1}]
  %s7 = inlined_call_operand.hbm [shape: f32[2,1,128], index: 7, kind: output, shape index: {2}]
  %8 = xla_tuple %s5, %s6, %s7
  %s9 = sld [smem:[#allocation0]]
  $region81: #{tpu_custom_call.1} parent=0
    _
  %s11 = ssub.s32 1, %s9
  %s12 = scalar_select 0, %s11, %s9
  %13 = sst [smem:[#allocation5]] %s0
  $region1: #{tpu_custom_call.1} parent=0
    #allocation6 [shape = 'u8[8192]{0}', space=vmem, size = 0x2000, scoped, tag = 'input window, operand 1']
    #allocation7 [shape = 's32[2]{0}', space=sflag, size = 0x8, scoped, tag = 'scoped memory for tpu_custom_call.1']
    #allocation8 [shape = 's32[2]{0}', space=sflag, size = 0x8, scoped, tag = 'scoped memory for tpu_custom_call.1']
    #allocation9 [shape = 'u8[1024]{0}', space=vmem, size = 0x400, scoped, tag = 'output window, operand 0']
    #allocation10 [shape = 'u8[1024]{0}', space=vmem, size = 0x400, scoped, tag = 'output window, operand 1']
    #allocation11 [shape = 's32[2]{0}', space=sflag, size = 0x8, scoped, tag = 'scoped memory for tpu_custom_call.1']
    #allocation12 [shape = 'u8[1024]{0}', space=vmem, size = 0x400, scoped, tag = 'output window, operand 2']
    %14 = vsyncpa [#allocation7], 0
    %s15 = scalar_lea.sflag [#allocation7], 1
    %16 = vsyncpa %s15, 0
    %17 = vsyncpa [#allocation8], 0
    %s18 = scalar_lea.sflag [#allocation8], 1
    %19 = vsyncpa %s18, 0
    %20 = vsyncpa [#allocation11], 0
    %s21 = scalar_lea.sflag [#allocation11], 1
    %22 = vsyncpa %s21, 0
    loop: start=0, step=1, limit=6
    $region2: #{tpu_custom_call.1} parent=1 // loop_pre_header
      _
    $region3: #{tpu_custom_call.1} parent=1 // loop_header
      %s24 = sphi 0, %s28
      %p25 = scmp.ge.s32.totalorder %s24, 6
      %s31 = sphi 0, %s43
      %s32 = sphi 0, %s39
      %s33 = sphi 0, %s31
      %s34 = sphi 0, %s32
      %s35 = sphi 0, %s33
      %s36 = sphi 0, %s34
      %s44 = sphi 0, %s44
      %s46 = sphi 0, %s44
      %s47 = sphi 0, %s46
      %s61 = sphi 0, %s47
      %s75 = sphi 0, %s77
      %s78 = sphi 0, %s75
      %s79 = sphi 0, %s78
      %s95 = sphi 0, %s79
      %s109 = sphi 0, %s111
      %s112 = sphi 0, %s109
      %s113 = sphi 0, %s112
      %s129 = sphi 0, %s113
      %s133 = sphi 0, %s133
      %s135 = sphi 0, %s133
      %s136 = sphi 0, %s135
      %s150 = sphi 0, %s136
      %s154 = sphi 0, %s154
      %s156 = sphi 0, %s154
      %s157 = sphi 0, %s156
      %s171 = sphi 0, %s157
      %s177 = sphi 0, %s179
      %s180 = sphi 0, %s177
      %s181 = sphi 0, %s180
      %s197 = sphi 0, %s181
      %s203 = sphi 0, %s205
      %s206 = sphi 0, %s203
      %s207 = sphi 0, %s206
      %s223 = sphi 0, %s207
      %s229 = sphi 0, %s231
      %s232 = sphi 0, %s229
      %s233 = sphi 0, %s232
      %s249 = sphi 0, %s233
    $region4: #{tpu_custom_call.1} parent=1 // loop_header_branch
      %27 = sbr.rel (%p25) target = $region8
    $region5: #{tpu_custom_call.1} parent=1 // loop_body
      %s29 = ssub.s32 %s24, 1
      %s30 = ssub.s32 %s24, 2
      %s37 = sadd.s32 1, %s32
      %p38 = scmp.ge.s32.totalorder %s37, 2
      %s39 = scalar_select %p38, 0, %s37
      %s40 = sadd.s32 1, %s31
      %s41 = scalar_select %p38, %s40, %s31
      %p42 = scmp.ge.s32.totalorder %s41, 2
      %s43 = scalar_select %p42, 0, %s41
      %s45 = sadd.s32 %s44, 1
      %p48 = scmp.eq.s32.totalorder %s24, 3
      %p49 = scmp.ne.s32.totalorder %s44, %s46
      %p50 = scmp.eq.s32.totalorder %s24, 0
      %p51 = por %p49, %p50
      %p52 = scmp.ne.s32.totalorder %s44, %s46
      %p53 = scmp.eq.s32.totalorder %s29, 3
      %p54 = por %p52, %p53
      %p55 = scmp.ne.s32.totalorder %s46, %s47
      %p56 = scmp.eq.s32.totalorder %s29, 0
      %p57 = por %p55, %p56
      %p58 = scmp.ne.s32.totalorder %s46, %s47
      %p59 = scmp.eq.s32.totalorder %s30, 3
      %p60 = por %p58, %p59
      %p62 = scmp.ne.s32.totalorder %s47, %s61
      %p63 = scmp.eq.s32.totalorder %s30, 0
      %p64 = por %p62, %p63
      %s65 = smul.u32 %s31, 2
      %s66 = sadd.s32 %s65, %s32
      %p67 = scmp.lt.s32.totalorder %s66, 2
      %s68 = scalar_select %p67, %s66, 2
      %s69 = smul.u32 %s43, 2
      %s70 = sadd.s32 %s69, %s39
      %p71 = scmp.lt.s32.totalorder %s70, 2
      %s72 = scalar_select %p71, %s70, 2
      %s73 = ssub.s32 %s68, %s72
      %p74 = scmp.eq.s32.totalorder %s73, 0
      %s76 = sadd.s32 %s75, 1
      %s77 = scalar_select %p74, %s75, %s76
      %p80 = pneg %p74
      %p81 = scmp.eq.s32.totalorder %s24, 3
      %p82 = por %p80, %p81
      %p83 = scmp.ne.s32.totalorder %s75, %s78
      %p84 = scmp.eq.s32.totalorder %s24, 0
      %p85 = por %p83, %p84
      %p86 = scmp.ne.s32.totalorder %s75, %s78
      %p87 = scmp.eq.s32.totalorder %s29, 3
      %p88 = por %p86, %p87
      %p89 = scmp.ne.s32.totalorder %s78, %s79
      %p90 = scmp.eq.s32.totalorder %s29, 0
      %p91 = por %p89, %p90
      %p92 = scmp.ne.s32.totalorder %s78, %s79
      %p93 = scmp.eq.s32.totalorder %s30, 3
      %p94 = por %p92, %p93
      %p96 = scmp.ne.s32.totalorder %s79, %s95
      %p97 = scmp.eq.s32.totalorder %s30, 0
      %p98 = por %p96, %p97
      %s99 = smul.u32 %s31, 2
      %s100 = sadd.s32 %s99, %s32
      %p101 = scmp.lt.s32.totalorder %s100, 2
      %s102 = scalar_select %p101, %s100, 2
      %s103 = smul.u32 %s43, 2
      %s104 = sadd.s32 %s103, %s39
      %p105 = scmp.lt.s32.totalorder %s104, 2
      %s106 = scalar_select %p105, %s104, 2
      %s107 = ssub.s32 %s102, %s106
      %p108 = scmp.eq.s32.totalorder %s107, 0
      %s110 = sadd.s32 %s109, 1
      %s111 = scalar_select %p108, %s109, %s110
      %p114 = pneg %p108
      %p115 = scmp.eq.s32.totalorder %s24, 3
      %p116 = por %p114, %p115
      %p117 = scmp.ne.s32.totalorder %s109, %s112
      %p118 = scmp.eq.s32.totalorder %s24, 0
      %p119 = por %p117, %p118
      %p120 = scmp.ne.s32.totalorder %s109, %s112
      %p121 = scmp.eq.s32.totalorder %s29, 3
      %p122 = por %p120, %p121
      %p123 = scmp.ne.s32.totalorder %s112, %s113
      %p124 = scmp.eq.s32.totalorder %s29, 0
      %p125 = por %p123, %p124
      %p126 = scmp.ne.s32.totalorder %s112, %s113
      %p127 = scmp.eq.s32.totalorder %s30, 3
      %p128 = por %p126, %p127
      %p130 = scmp.ne.s32.totalorder %s113, %s129
      %p131 = scmp.eq.s32.totalorder %s30, 0
      %p132 = por %p130, %p131
      %s134 = sadd.s32 %s133, 1
      %p137 = scmp.eq.s32.totalorder %s24, 3
      %p138 = scmp.ne.s32.totalorder %s133, %s135
      %p139 = scmp.eq.s32.totalorder %s24, 0
      %p140 = por %p138, %p139
      %p141 = scmp.ne.s32.totalorder %s133, %s135
      %p142 = scmp.eq.s32.totalorder %s29, 3
      %p143 = por %p141, %p142
      %p144 = scmp.ne.s32.totalorder %s135, %s136
      %p145 = scmp.eq.s32.totalorder %s29, 0
      %p146 = por %p144, %p145
      %p147 = scmp.ne.s32.totalorder %s135, %s136
      %p148 = scmp.eq.s32.totalorder %s30, 3
      %p149 = por %p147, %p148
      %p151 = scmp.ne.s32.totalorder %s136, %s150
      %p152 = scmp.eq.s32.totalorder %s30, 0
      %p153 = por %p151, %p152
      %s155 = sadd.s32 %s154, 1
      %p158 = scmp.eq.s32.totalorder %s24, 3
      %p159 = scmp.ne.s32.totalorder %s154, %s156
      %p160 = scmp.eq.s32.totalorder %s24, 0
      %p161 = por %p159, %p160
      %p162 = scmp.ne.s32.totalorder %s154, %s156
      %p163 = scmp.eq.s32.totalorder %s29, 3
      %p164 = por %p162, %p163
      %p165 = scmp.ne.s32.totalorder %s156, %s157
      %p166 = scmp.eq.s32.totalorder %s29, 0
      %p167 = por %p165, %p166
      %p168 = scmp.ne.s32.totalorder %s156, %s157
      %p169 = scmp.eq.s32.totalorder %s30, 3
      %p170 = por %p168, %p169
      %p172 = scmp.ne.s32.totalorder %s157, %s171
      %p173 = scmp.eq.s32.totalorder %s30, 0
      %p174 = por %p172, %p173
      %s175 = ssub.s32 %s31, %s43
      %p176 = scmp.eq.s32.totalorder %s175, 0
      %s178 = sadd.s32 %s177, 1
      %s179 = scalar_select %p176, %s177, %s178
      %p182 = pneg %p176
      %p183 = scmp.eq.s32.totalorder %s24, 3
      %p184 = por %p182, %p183
      %p185 = scmp.ne.s32.totalorder %s177, %s180
      %p186 = scmp.eq.s32.totalorder %s24, 0
      %p187 = por %p185, %p186
      %p188 = scmp.ne.s32.totalorder %s177, %s180
      %p189 = scmp.eq.s32.totalorder %s29, 3
      %p190 = por %p188, %p189
      %p191 = scmp.ne.s32.totalorder %s180, %s181
      %p192 = scmp.eq.s32.totalorder %s29, 0
      %p193 = por %p191, %p192
      %p194 = scmp.ne.s32.totalorder %s180, %s181
      %p195 = scmp.eq.s32.totalorder %s30, 3
      %p196 = por %p194, %p195
      %p198 = scmp.ne.s32.totalorder %s181, %s197
      %p199 = scmp.eq.s32.totalorder %s30, 0
      %p200 = por %p198, %p199
      %s201 = ssub.s32 %s31, %s43
      %p202 = scmp.eq.s32.totalorder %s201, 0
      %s204 = sadd.s32 %s203, 1
      %s205 = scalar_select %p202, %s203, %s204
      %p208 = pneg %p202
      %p209 = scmp.eq.s32.totalorder %s24, 3
      %p210 = por %p208, %p209
      %p211 = scmp.ne.s32.totalorder %s203, %s206
      %p212 = scmp.eq.s32.totalorder %s24, 0
      %p213 = por %p211, %p212
      %p214 = scmp.ne.s32.totalorder %s203, %s206
      %p215 = scmp.eq.s32.totalorder %s29, 3
      %p216 = por %p214, %p215
      %p217 = scmp.ne.s32.totalorder %s206, %s207
      %p218 = scmp.eq.s32.totalorder %s29, 0
      %p219 = por %p217, %p218
      %p220 = scmp.ne.s32.totalorder %s206, %s207
      %p221 = scmp.eq.s32.totalorder %s30, 3
      %p222 = por %p220, %p221
      %p224 = scmp.ne.s32.totalorder %s207, %s223
      %p225 = scmp.eq.s32.totalorder %s30, 0
      %p226 = por %p224, %p225
      %s227 = ssub.s32 %s31, %s43
      %p228 = scmp.eq.s32.totalorder %s227, 0
      %s230 = sadd.s32 %s229, 1
      %s231 = scalar_select %p228, %s229, %s230
      %p234 = pneg %p228
      %p235 = scmp.eq.s32.totalorder %s24, 3
      %p236 = por %p234, %p235
      %p237 = scmp.ne.s32.totalorder %s229, %s232
      %p238 = scmp.eq.s32.totalorder %s24, 0
      %p239 = por %p237, %p238
      %p240 = scmp.ne.s32.totalorder %s229, %s232
      %p241 = scmp.eq.s32.totalorder %s29, 3
      %p242 = por %p240, %p241
      %p243 = scmp.ne.s32.totalorder %s232, %s233
      %p244 = scmp.eq.s32.totalorder %s29, 0
      %p245 = por %p243, %p244
      %p246 = scmp.ne.s32.totalorder %s232, %s233
      %p247 = scmp.eq.s32.totalorder %s30, 3
      %p248 = por %p246, %p247
      %p250 = scmp.ne.s32.totalorder %s233, %s249
      %p251 = scmp.eq.s32.totalorder %s30, 0
      %p252 = por %p250, %p251
      %p253 = scmp.le.s32.totalorder 1, %s24
      %p254 = scmp.lt.s32.totalorder %s24, 5
      %p255 = pnand %p253, %p254
      %p256 = pneg %p255
      // Predicated region
      $region9: #{tpu_custom_call.1} parent=5 // pred_check
        _
      $region10: #{tpu_custom_call.1} parent=5 // pred_check_branch
        %258 = sbr.rel (%p255) target = $region12
      $region11: #{tpu_custom_call.1} parent=5 // pred_region
        %s259 = ssub.s32 %s24, 1
        // Predicated region
        $region13: #{tpu_custom_call.1} parent=11 // pred_check
          %p260 = pneg %p57
        $region14: #{tpu_custom_call.1} parent=11 // pred_check_branch
          %262 = sbr.rel (%p260) target = $region16
        $region15: #{tpu_custom_call.1} parent=11 // pred_region
          _
        $region16: #{tpu_custom_call.1} parent=11 // pred_fallthru
          _
        // Predicated region
        $region17: #{tpu_custom_call.1} parent=11 // pred_check
          %p263 = pneg %p146
        $region18: #{tpu_custom_call.1} parent=11 // pred_check_branch
          %265 = sbr.rel (%p263) target = $region20
        $region19: #{tpu_custom_call.1} parent=11 // pred_region
          _
        $region20: #{tpu_custom_call.1} parent=11 // pred_fallthru
          _
        // Predicated region
        $region21: #{tpu_custom_call.1} parent=11 // pred_check
          %p266 = pneg %p167
        $region22: #{tpu_custom_call.1} parent=11 // pred_check_branch
          %268 = sbr.rel (%p266) target = $region24
        $region23: #{tpu_custom_call.1} parent=11 // pred_region
          _
        $region24: #{tpu_custom_call.1} parent=11 // pred_fallthru
          _
      $region12: #{tpu_custom_call.1} parent=5 // pred_fallthru
        _
      %p269 = scmp.lt.s32.totalorder %s24, 4
      // Predicated region
      $region25: #{tpu_custom_call.1} parent=5 // pred_check
        %p270 = pneg %p269
      $region26: #{tpu_custom_call.1} parent=5 // pred_check_branch
        %272 = sbr.rel (%p270) target = $region28
      $region27: #{tpu_custom_call.1} parent=5 // pred_region
        // Predicated region
        $region29: #{tpu_custom_call.1} parent=27 // pred_check
          %p273 = pneg %p85
        $region30: #{tpu_custom_call.1} parent=27 // pred_check_branch
          %275 = sbr.rel (%p273) target = $region32
        $region31: #{tpu_custom_call.1} parent=27 // pred_region
          %s276 = sand.u32 %s75, 1
          %s277 = scalar_lea.sflag [#allocation7], %s276
          %s278 = sand.u32 %s75, 1
          %s279 = smul.addr %s278, 8
          %s280 = scalar_lea.vmem [#allocation6], %s279
          %s281 = smul.u32 %s31, 2
          %s282 = sadd.s32 %s281, %s32
          %p283 = scmp.lt.s32.totalorder %s282, 2
          %s284 = scalar_select %p283, %s282, 2
          %286 = vsyncadd %s277, 0
          %s287 = smul.addr %s284, 8
          %s288 = scalar_lea.hbm %s1, %s287
          %s290 = sshll.u32 %s288, 4
          %s291 = int_to_ptr.hbm [resolvable:$true] %s290
          %s292 = sshll.u32 %s280, 4
          %s293 = int_to_ptr.vmem [resolvable:$true] %s292
          %295 = dma.hbm_to_vmem [thread:$0]  %s291, 128, %s293, %s277
        $region32: #{tpu_custom_call.1} parent=27 // pred_fallthru
          _
        // Predicated region
        $region33: #{tpu_custom_call.1} parent=27 // pred_check
          %p296 = pneg %p119
        $region34: #{tpu_custom_call.1} parent=27 // pred_check_branch
          %298 = sbr.rel (%p296) target = $region36
        $region35: #{tpu_custom_call.1} parent=27 // pred_region
          %s299 = smul.u32 %s31, 2
          %s300 = sadd.s32 %s299, %s32
          %p301 = scmp.lt.s32.totalorder %s300, 2
          %s302 = scalar_select %p301, %s300, 2
          %p303 = scmp.lt.s32.totalorder %s302, 2
          %s304 = scalar_select %p303, %s302, 2
          %s305 = scalar_lea.vmem %s2, %s304
          %s306 = smul.u32 %s31, 2
          %s307 = sadd.s32 %s306, %s32
          %p308 = scmp.lt.s32.totalorder %s307, 2
          %s309 = scalar_select %p308, %s307, 2
        $region36: #{tpu_custom_call.1} parent=27 // pred_fallthru
          _
      $region28: #{tpu_custom_call.1} parent=5 // pred_fallthru
        _
      %p310 = scmp.le.s32.totalorder 1, %s24
      %p311 = scmp.lt.s32.totalorder %s24, 5
      %p312 = pnand %p310, %p311
      %p313 = pneg %p312
      // Predicated region
      $region37: #{tpu_custom_call.1} parent=5 // pred_check
        _
      $region38: #{tpu_custom_call.1} parent=5 // pred_check_branch
        %315 = sbr.rel (%p312) target = $region40
      $region39: #{tpu_custom_call.1} parent=5 // pred_region
        %s316 = ssub.s32 %s24, 1
        %s317 = sand.u32 %s78, 1
        %s318 = scalar_lea.sflag [#allocation7], %s317
        %s319 = sand.u32 %s78, 1
        %s320 = smul.addr %s319, 8
        %s321 = scalar_lea.vmem [#allocation6], %s320
        // Predicated region
        $region41: #{tpu_custom_call.1} parent=39 // pred_check
          %p322 = pneg %p91
        $region42: #{tpu_custom_call.1} parent=39 // pred_check_branch
          %324 = sbr.rel (%p322) target = $region44
        $region43: #{tpu_custom_call.1} parent=39 // pred_region
          %326 = dma.done %s318, 128
        $region44: #{tpu_custom_call.1} parent=39 // pred_fallthru
          _
        %p327 = pneg %p57
        %p328 = pneg %p54
        %s329 = sand.u32 %s78, 1
        %s330 = scalar_lea.sflag [#allocation7], %s329
        %s331 = sand.u32 %s78, 1
        %s332 = smul.addr %s331, 8
        %s333 = scalar_lea.vmem [#allocation6], %s332
        %p334 = pneg %p91
        %p335 = pneg %p88
        %s336 = smul.u32 %s33, 2
        %s337 = sadd.s32 %s336, %s34
        %p338 = scmp.lt.s32.totalorder %s337, 2
        %s339 = scalar_select %p338, %s337, 2
        %p340 = scmp.lt.s32.totalorder %s339, 2
        %s341 = scalar_select %p340, %s339, 2
        %s342 = scalar_lea.vmem %s2, %s341
        %p343 = pneg %p125
        %p344 = pneg %p122
        %p345 = pneg %p146
        %p346 = pneg %p143
        %p347 = pneg %p167
        %p348 = pneg %p164
        %p349 = pneg %p193
        %p350 = pneg %p190
        %s351 = sand.u32 %s180, 1
        %s352 = scalar_lea.sflag [#allocation8], %s351
        %s353 = sand.u32 %s180, 1
        %s354 = scalar_lea.vmem [#allocation9], %s353
        %p355 = pneg %p219
        %p356 = pneg %p216
        %s357 = sand.u32 %s29, 1
        %s358 = scalar_lea.sflag [#allocation11], %s357
        %s359 = sand.u32 %s206, 1
        %s360 = scalar_lea.vmem [#allocation10], %s359
        %p361 = pneg %p245
        %p362 = pneg %p242
        %s363 = sand.u32 %s29, 1
        %s364 = scalar_lea.sflag [#allocation11], %s363
        %s365 = sand.u32 %s232, 1
        %s366 = scalar_lea.vmem [#allocation12], %s365
        %s367 = smul.u32 %s33, 2
        %s368 = sadd.s32 %s367, %s34
        %p369 = scmp.lt.s32.totalorder %s368, 2
        %s370 = scalar_select %p369, %s368, 2
        %s371 = smul.u32 %s33, 2
        %s372 = sadd.s32 %s371, %s34
        %p373 = scmp.lt.s32.totalorder %s372, 2
        %s374 = scalar_select %p373, %s372, 2
        %p375 = scmp.lt.s32.totalorder %s374, 2
        %s376 = scalar_select %p375, %s374, 2
        %s377 = scalar_lea.vmem %s2, %s376
        %s378 = smul.u32 %s33, 2
        %s379 = sadd.s32 %s378, %s34
        %p380 = scmp.lt.s32.totalorder %s379, 2
        %s381 = scalar_select %p380, %s379, 2
        %p382 = scmp.eq.s32.totalorder %s34, 0
        // Predicated region
        $region45: #{tpu_custom_call.1} parent=39 // pred_check
          %p383 = pneg %p382
        $region46: #{tpu_custom_call.1} parent=39 // pred_check_branch
          %385 = sbr.rel (%p383) target = $region48
        $region47: #{tpu_custom_call.1} parent=39 // pred_region
          %386 = vst [vmem:[#allocation2] sm:$0x1] 0.0
          %387 = vst [vmem:[#allocation3] sm:$0x1] 0.0
          %v388 = vlaneseq
          %v389 = vshrl.u32 %v388, 7
          %390 = vst [vmem:[#allocation4] sm:$0x7f] %v389
        $region48: #{tpu_custom_call.1} parent=39 // pred_fallthru
          _
        %s391 = smul.u32 %s33, 2
        %s392 = sadd.s32 %s391, %s34
        %s393 = smul.u32 %s392, 128
        %v394 = vlaneseq
        %v395 = vand.u32 %v394, 127
        %v396 = vstv %s393
        %v397 = vadd.s32 %v396, %v395
        %vm398 = vcmp.lt.s32.totalorder %v397, 300
        %v399 = vld [vmem:[%s321] sm:$0x7f]
        %v400 = vld [vmem:[%s377] sm:$0x1]
        %v401 = vld [vmem:[%s4] sm:$0x7f]
        %v402 = vld [vmem:[#allocation4] sm:$0x7f]
        %v403 = vperm.slane %v400, 0
        %vm404 = vcmp.eq.s32.totalorder %v402, %v403
        %vm405 = vcmask 1046528
        %v406 = vsel %vm405, %v399, -inf
        %v407 = vrot.slane %v406, 4
        %v408 = vmax.f32 %v406, %v407
        %v409 = vrot.slane %v408, 2
        %v410 = vmax.f32 %v408, %v409
        %v411 = vrot.slane %v410, 1
        %v412 = vmax.f32 %v410, %v411
        %v413 = vsub.f32 %v399, %v412
        %v414 = vmul.f32 %v413, 1.442695
        %v415 = vpow.pop %v414
        %v416 = vsel %vm405, %v415, 0.0
        %v417 = vrot.slane %v416, 4
        %v418 = vadd.f32 %v416, %v417
        %v419 = vrot.slane %v418, 2
        %v420 = vadd.f32 %v418, %v419
        %v421 = vrot.slane %v420, 1
        %v422 = vadd.f32 %v420, %v421
        %v423 = vlog2.pop %v422
        %v424 = vmul.f32 %v423, 0.6931472
        %v425 = vadd.f32 %v412, %v424
        %v426 = vsel %vm404, %v399, 0.0
        %v427 = vsel %vm405, %v426, 0.0
        %v428 = vrot.slane %v427, 4
        %v429 = vadd.f32 %v427, %v428
        %v430 = vrot.slane %v429, 2
        %v431 = vadd.f32 %v429, %v430
        %v432 = vrot.slane %v431, 1
        %v433 = vadd.f32 %v431, %v432
        %435 = vset.pattern.permute.xlu0 0
        %436 = vperm.xlu0 %435, %v401
        %v437 = vpop.permute.xlu0 %436
        %v439 = vsel %vm404, %v437, 0.0
        %v440 = vsel %vm405, %v439, 0.0
        %v441 = vrot.slane %v440, 4
        %v442 = vadd.f32 %v440, %v441
        %v443 = vrot.slane %v442, 2
        %v444 = vadd.f32 %v442, %v443
        %v445 = vrot.slane %v444, 1
        %v446 = vadd.f32 %v444, %v445
        %v447 = vsub.f32 %v425, %v433
        %v448 = vld [vmem:[#allocation2] sm:$0x1]
        %v449 = vmul.f32 %v446, %v447
        %v450 = vsel %vm398, %v449, 0.0
        %v451 = vadd.f32 %v448, %v450
        %452 = vst [vmem:[#allocation2] sm:$0x1] %v451
        %v453 = vld [vmem:[#allocation3] sm:$0x1]
        %v454 = vsel %vm398, %v446, 0.0
        %v455 = vadd.f32 %v453, %v454
        %456 = vst [vmem:[#allocation3] sm:$0x1] %v455
        %p457 = scmp.eq.s32.totalorder %s34, 1
        // Predicated region
        $region49: #{tpu_custom_call.1} parent=39 // pred_check
          %p458 = pneg %p457
        $region50: #{tpu_custom_call.1} parent=39 // pred_check_branch
          %460 = sbr.rel (%p458) target = $region52
        $region51: #{tpu_custom_call.1} parent=39 // pred_region
          %v461 = vld [vmem:[#allocation2] sm:$0x1]
          %vm462 = vcmask 1040384
          %v463 = vsel %vm462, %v461, 0.0
          %464 = vadd.xlane.f32.xlu0 %v463
          %v465 = vpop.xlane.xlu0 %464
          %v466 = vrot.slane %v465, 4
          %v467 = vadd.f32 %v465, %v466
          %v468 = vrot.slane %v467, 2
          %v469 = vadd.f32 %v467, %v468
          %v470 = vrot.slane %v469, 1
          %v471 = vadd.f32 %v469, %v470
          %s472 = vtos %v471
          %v473 = vld [vmem:[#allocation3] sm:$0x1]
          %v474 = vsel %vm462, %v473, 0.0
          %475 = vadd.xlane.f32.xlu0 %v474
          %v476 = vpop.xlane.xlu0 %475
          %v477 = vrot.slane %v476, 4
          %v478 = vadd.f32 %v476, %v477
          %v479 = vrot.slane %v478, 2
          %v480 = vadd.f32 %v478, %v479
          %v481 = vrot.slane %v480, 1
          %v482 = vadd.f32 %v480, %v481
          %s483 = vtos %v482
          %v484 = vld [vmem:[%s3] sm:$0x1]
          %s485 = sld [smem:[#allocation5]]
          %v486 = vstv %s485
          %vm487 = vcmp.eq.s32.totalorder %v395, %v486
          %vm488 = vcmask 49152
          %v489 = vsel %vm488, %v484, -inf
          %490 = vmax.xlane.f32.xlu0 %v489
          %v491 = vpop.xlane.xlu0 %490
          %v492 = vsub.f32 %v484, %v491
          %v493 = vmul.f32 %v492, 1.442695
          %v494 = vpow.pop %v493
          %v495 = vsel %vm488, %v494, 0.0
          %496 = vadd.xlane.f32.xlu0 %v495
          %v497 = vpop.xlane.xlu0 %496
          %v498 = vlog2.pop %v497
          %v499 = vmul.f32 %v498, 0.6931472
          %v500 = vadd.f32 %v491, %v499
          %v501 = vsel %vm487, %v484, 0.0
          %v502 = vsel %vm488, %v501, 0.0
          %503 = vadd.xlane.f32.xlu0 %v502
          %v504 = vpop.xlane.xlu0 %503
          %v505 = vsub.f32 %v500, %v504
          %s506 = vtos %v505
          %v507 = vstv %s472
          %508 = vst [vmem:[%s354] sm:$0x1] %v507
          %v509 = vstv %s483
          %510 = vst [vmem:[%s360] sm:$0x1] %v509
          %v511 = vstv %s506
          %512 = vst [vmem:[%s366] sm:$0x1] %v511
        $region52: #{tpu_custom_call.1} parent=39 // pred_fallthru
          _
        %s513 = sand.u32 %s180, 1
        %s514 = scalar_lea.sflag [#allocation8], %s513
        %s515 = sand.u32 %s180, 1
        %s516 = scalar_lea.vmem [#allocation9], %s515
        %s517 = sand.u32 %s29, 1
        %s518 = scalar_lea.sflag [#allocation11], %s517
        %s519 = sand.u32 %s206, 1
        %s520 = scalar_lea.vmem [#allocation10], %s519
        %s521 = sand.u32 %s29, 1
        %s522 = scalar_lea.sflag [#allocation11], %s521
        %s523 = sand.u32 %s232, 1
        %s524 = scalar_lea.vmem [#allocation12], %s523
        // Predicated region
        $region53: #{tpu_custom_call.1} parent=39 // pred_check
          %p525 = pneg %p190
        $region54: #{tpu_custom_call.1} parent=39 // pred_check_branch
          %527 = sbr.rel (%p525) target = $region56
        $region55: #{tpu_custom_call.1} parent=39 // pred_region
          %529 = vsyncadd %s514, 0
          %s530 = scalar_lea.hbm %s5, %s33
          %s532 = sshll.u32 %s516, 4
          %s533 = int_to_ptr.vmem [resolvable:$true] %s532
          %s534 = sshll.u32 %s530, 4
          %s535 = int_to_ptr.hbm [resolvable:$true] %s534
          %537 = dma.vmem_to_hbm [thread:$0]  %s533, 16, %s535, %s514
        $region56: #{tpu_custom_call.1} parent=39 // pred_fallthru
          _
        // Predicated region
        $region57: #{tpu_custom_call.1} parent=39 // pred_check
          %p538 = pneg %p216
        $region58: #{tpu_custom_call.1} parent=39 // pred_check_branch
          %540 = sbr.rel (%p538) target = $region60
        $region59: #{tpu_custom_call.1} parent=39 // pred_region
          %542 = vsyncadd %s518, 0
          %s543 = scalar_lea.hbm %s6, %s33
          %s545 = sshll.u32 %s520, 4
          %s546 = int_to_ptr.vmem [resolvable:$true] %s545
          %s547 = sshll.u32 %s543, 4
          %s548 = int_to_ptr.hbm [resolvable:$true] %s547
          %550 = dma.vmem_to_hbm [thread:$0]  %s546, 16, %s548, %s518
        $region60: #{tpu_custom_call.1} parent=39 // pred_fallthru
          _
        // Predicated region
        $region61: #{tpu_custom_call.1} parent=39 // pred_check
          %p551 = pneg %p242
        $region62: #{tpu_custom_call.1} parent=39 // pred_check_branch
          %553 = sbr.rel (%p551) target = $region64
        $region63: #{tpu_custom_call.1} parent=39 // pred_region
          %555 = vsyncadd %s522, 0
          %s556 = scalar_lea.hbm %s7, %s33
          %s558 = sshll.u32 %s524, 4
          %s559 = int_to_ptr.vmem [resolvable:$true] %s558
          %s560 = sshll.u32 %s556, 4
          %s561 = int_to_ptr.hbm [resolvable:$true] %s560
          %563 = dma.vmem_to_hbm [thread:$0]  %s559, 16, %s561, %s522
        $region64: #{tpu_custom_call.1} parent=39 // pred_fallthru
          _
      $region40: #{tpu_custom_call.1} parent=5 // pred_fallthru
        _
      %p564 = scmp.le.s32.totalorder 2, %s24
      // Predicated region
      $region65: #{tpu_custom_call.1} parent=5 // pred_check
        %p565 = pneg %p564
      $region66: #{tpu_custom_call.1} parent=5 // pred_check_branch
        %567 = sbr.rel (%p565) target = $region68
      $region67: #{tpu_custom_call.1} parent=5 // pred_region
        %s568 = ssub.s32 %s24, 2
        // Predicated region
        $region69: #{tpu_custom_call.1} parent=67 // pred_check
          %p569 = pneg %p196
        $region70: #{tpu_custom_call.1} parent=67 // pred_check_branch
          %571 = sbr.rel (%p569) target = $region72
        $region71: #{tpu_custom_call.1} parent=67 // pred_region
          %s572 = sand.u32 %s181, 1
          %s573 = scalar_lea.sflag [#allocation8], %s572
          %s574 = sand.u32 %s181, 1
          %s575 = scalar_lea.vmem [#allocation9], %s574
          %577 = dma.done %s573, 16
        $region72: #{tpu_custom_call.1} parent=67 // pred_fallthru
          _
        // Predicated region
        $region73: #{tpu_custom_call.1} parent=67 // pred_check
          %p578 = pneg %p222
        $region74: #{tpu_custom_call.1} parent=67 // pred_check_branch
          %580 = sbr.rel (%p578) target = $region76
        $region75: #{tpu_custom_call.1} parent=67 // pred_region
          %s581 = sand.u32 %s30, 1
          %s582 = scalar_lea.sflag [#allocation11], %s581
          %s583 = sand.u32 %s207, 1
          %s584 = scalar_lea.vmem [#allocation10], %s583
          %586 = dma.done %s582, 16
        $region76: #{tpu_custom_call.1} parent=67 // pred_fallthru
          _
        // Predicated region
        $region77: #{tpu_custom_call.1} parent=67 // pred_check
          %p587 = pneg %p248
        $region78: #{tpu_custom_call.1} parent=67 // pred_check_branch
          %589 = sbr.rel (%p587) target = $region80
        $region79: #{tpu_custom_call.1} parent=67 // pred_region
          %s590 = sand.u32 %s30, 1
          %s591 = scalar_lea.sflag [#allocation11], %s590
          %s592 = sand.u32 %s233, 1
          %s593 = scalar_lea.vmem [#allocation12], %s592
          %595 = dma.done %s591, 16
        $region80: #{tpu_custom_call.1} parent=67 // pred_fallthru
          _
      $region68: #{tpu_custom_call.1} parent=5 // pred_fallthru
        _
    $region6: #{tpu_custom_call.1} parent=1 // loop_footer
      %s28 = sadd.s32 1, %s24
    $region7: #{tpu_custom_call.1} parent=1 // loop_footer_branch
      %23 = sbr.rel target = $region3
    $region8: #{tpu_custom_call.1} parent=1 // loop_exit
      _
    %596 = vsyncpa [#allocation7], 1
    %s597 = scalar_lea.sflag [#allocation7], 1
    %598 = vsyncpa %s597, 1
    %599 = vsyncpa [#allocation8], 1
    %s600 = scalar_lea.sflag [#allocation8], 1
    %601 = vsyncpa %s600, 1
    %602 = vsyncpa [#allocation11], 1
    %s603 = scalar_lea.sflag [#allocation11], 1
    %604 = vsyncpa %s603, 1

</llo_original>
